<compile_context>
chip_gen: v6e
topology: v6e:2x2x1
jax: 0.10.0
libtpu: 0.0.40
codegen_flags: <defaults>
</compile_context>

<pallas_src>
import functools

import jax
import jax.numpy as jnp
from jax.experimental import pallas as pl
from jax.experimental.pallas import tpu as pltpu


# ----------------------------- Pallas kernel ---------------------------------
def _policy_mlp_kernel(x_ref, w1_ref, b1_ref, w2_ref, b2_ref, w3_ref, b3_ref,
                       out_ref):
    """Fused 3-layer MLP (tanh, tanh, linear) on one batch tile."""
    x = x_ref[...]                                                    # (TB, obs)
    h1 = jnp.tanh(
        jnp.dot(x, w1_ref[...], preferred_element_type=jnp.float32)
        + b1_ref[...])                                                # (TB, H)
    h2 = jnp.tanh(
        jnp.dot(h1, w2_ref[...], preferred_element_type=jnp.float32)
        + b2_ref[...])                                                # (TB, H)
    # Lane-dense (TB, 128k) store; padded action columns are sliced off by
    # the wrapper.
    out_ref[...] = (
        jnp.dot(h2, w3_ref[...], preferred_element_type=jnp.float32)
        + b3_ref[...])                                                # (TB, act_p)


# ------------------------------- wrapper --------------------------------------
@functools.partial(jax.jit, static_argnames=("batch_tile",))
def deterministic_policy_forward(x, params, batch_tile=512):
    """Deterministic SB3 MlpPolicy forward pass via a single pallas_call.

    x: (B, obs_dim) float32 observations.
    params: dict of (w1, b1, w2, b2, w3, b3); weights stored as (in, out),
            i.e. the transpose of PyTorch nn.Linear weights.
    Returns: (B, act_dim) float32 deterministic actions (distribution mean).
    """
    assert batch_tile % 8 == 0, "batch_tile must be sublane-aligned (mult of 8)"

    w1, b1 = params["w1"], params["b1"]
    w2, b2 = params["w2"], params["b2"]
    w3, b3 = params["w3"], params["b3"]

    B, obs_dim = x.shape
    hidden = w1.shape[1]
    act_dim = w3.shape[1]

    # Lane-dense output: pad the action dimension to a multiple of 128 lanes
    # so output stores are unmasked full-vreg vst (biggest win on v5e's single
    # store slot).  The pad is a few KB and happens on the weights, not x.
    act_p = pl.cdiv(act_dim, 128) * 128
    if act_p != act_dim:
        w3 = jnp.pad(w3, ((0, 0), (0, act_p - act_dim)))
        b3 = jnp.pad(b3, ((0, 0), (0, act_p - act_dim)))

    # Batch tiling:
    #  - tiny batches: one exact block (block dims == array dims, always legal,
    #    no padding copy needed),
    #  - large batches: batch_tile-sized blocks; Pallas masks the partial last
    #    block, so no host-side pad-and-copy of x either.
    tb = B if B <= batch_tile else batch_tile
    grid = (pl.cdiv(B, tb),)

    cost = pl.CostEstimate(
        flops=2 * B * (obs_dim * hidden + hidden * hidden + hidden * act_p),
        transcendentals=2 * B * hidden,  # two tanh layers
        bytes_accessed=4 * (B * obs_dim + B * act_p
                            + obs_dim * hidden + hidden * hidden
                            + hidden * act_p + 2 * hidden + act_p),
    )

    out = pl.pallas_call(
        _policy_mlp_kernel,
        out_shape=jax.ShapeDtypeStruct((B, act_p), jnp.float32),
        grid_spec=pltpu.PrefetchScalarGridSpec(
            num_scalar_prefetch=0,
            grid=grid,
            in_specs=[
                # batch tile of observations
                pl.BlockSpec((tb, obs_dim), lambda i: (i, 0)),
                # weights / biases: full arrays, grid-invariant block (0, 0)
                pl.BlockSpec((obs_dim, hidden), lambda i: (0, 0)),
                pl.BlockSpec((1, hidden), lambda i: (0, 0)),
                pl.BlockSpec((hidden, hidden), lambda i: (0, 0)),
                pl.BlockSpec((1, hidden), lambda i: (0, 0)),
                pl.BlockSpec((hidden, act_p), lambda i: (0, 0)),
                pl.BlockSpec((1, act_p), lambda i: (0, 0)),
            ],
            out_specs=pl.BlockSpec((tb, act_p), lambda i: (i, 0)),
        ),
        compiler_params=pltpu.CompilerParams(
            dimension_semantics=("parallel",)),
        cost_estimate=cost,
    )(x, w1, b1, w2, b2, w3, b3)

    return out[:, :act_dim]


# ------------------------- deterministic parameter init ----------------------
def init_params(key, obs_dim, hidden, act_dim):
    """Deterministic synthetic weights (shapes match SB3 MlpPolicy pi-net)."""
    k1, k2, k3 = jax.random.split(key, 3)
    scale = 0.1
    return {
        # stored as (in_features, out_features), i.e. PyTorch W.T
        "w1": scale * jax.random.normal(k1, (obs_dim, hidden), jnp.float32),
        "b1": jnp.zeros((1, hidden), jnp.float32),
        "w2": scale * jax.random.normal(k2, (hidden, hidden), jnp.float32),
        "b2": jnp.zeros((1, hidden), jnp.float32),
        "w3": scale * jax.random.normal(k3, (hidden, act_dim), jnp.float32),
        "b3": jnp.zeros((1, act_dim), jnp.float32),
    }


def _reference_forward(x, p):
    h1 = jnp.tanh(x @ p["w1"] + p["b1"])
    h2 = jnp.tanh(h1 @ p["w2"] + p["b2"])
    return h2 @ p["w3"] + p["b3"]


if __name__ == "__main__":
    OBS, HID, ACT = 8, 32, 4

    key = jax.random.PRNGKey(0)
    k_x, k_x2, k_p = jax.random.split(key, 3)
    params = init_params(k_p, OBS, HID, ACT)

    # Small batch (single exact block path).
    x_small = jax.random.normal(k_x, (2, OBS), jnp.float32)
    act_small = jax.block_until_ready(deterministic_policy_forward(x_small, params))
    ref_small = _reference_forward(x_small, params)
    assert act_small.shape == (2, ACT)
    assert jnp.allclose(act_small, ref_small, atol=1e-5, rtol=1e-5)

    # Larger batch (multi-step parallel grid, lane-dense output path).
    x_big = jax.random.normal(k_x2, (1024, OBS), jnp.float32)
    act_big = jax.block_until_ready(deterministic_policy_forward(x_big, params))
    ref_big = _reference_forward(x_big, params)
    assert act_big.shape == (1024, ACT)
    assert jnp.allclose(act_big, ref_big, atol=1e-5, rtol=1e-5)

    print("KERNEL_OK")
</pallas_src>

<mosaic_0001>
module attributes {stable_mosaic.version = 11 : i64} {
  func.func @_policy_mlp_kernel(%arg0: i32, %arg1: memref<2x8xf32, #tpu.memory_space<vmem>>, %arg2: memref<8x32xf32, #tpu.memory_space<vmem>>, %arg3: memref<1x32xf32, #tpu.memory_space<vmem>>, %arg4: memref<32x32xf32, #tpu.memory_space<vmem>>, %arg5: memref<1x32xf32, #tpu.memory_space<vmem>>, %arg6: memref<32x128xf32, #tpu.memory_space<vmem>>, %arg7: memref<1x128xf32, #tpu.memory_space<vmem>>, %arg8: memref<2x128xf32, #tpu.memory_space<vmem>>) attributes {dimension_semantics = [#tpu.dimension_semantics<parallel>], iteration_bounds = array<i64: 1>, scalar_prefetch = 0 : i64, scratch_operands = 0 : i64, tpu.core_type = #tpu.core_type<tc>, window_params = [{transform_indices = @transform_0, window_bounds = array<i64: 2, 8>}, {pipeline_mode = #tpu.pipeline_mode<synchronous>, transform_indices = @transform_1, window_bounds = array<i64: 8, 32>}, {pipeline_mode = #tpu.pipeline_mode<synchronous>, transform_indices = @transform_2, window_bounds = array<i64: 1, 32>}, {pipeline_mode = #tpu.pipeline_mode<synchronous>, transform_indices = @transform_3, window_bounds = array<i64: 32, 32>}, {pipeline_mode = #tpu.pipeline_mode<synchronous>, transform_indices = @transform_4, window_bounds = array<i64: 1, 32>}, {pipeline_mode = #tpu.pipeline_mode<synchronous>, transform_indices = @transform_5, window_bounds = array<i64: 32, 128>}, {pipeline_mode = #tpu.pipeline_mode<synchronous>, transform_indices = @transform_6, window_bounds = array<i64: 1, 128>}, {transform_indices = @transform_7, window_bounds = array<i64: 2, 128>}]} {
    %c0 = arith.constant 0 : index
    %c0_0 = arith.constant 0 : index
    %0 = vector.load %arg1[%c0, %c0_0] : memref<2x8xf32, #tpu.memory_space<vmem>>, vector<2x8xf32>
    %c0_1 = arith.constant 0 : index
    %c0_2 = arith.constant 0 : index
    %1 = vector.load %arg2[%c0_1, %c0_2] : memref<8x32xf32, #tpu.memory_space<vmem>>, vector<8x32xf32>
    %cst = arith.constant dense<0.000000e+00> : vector<2x32xf32>
    %2 = tpu.matmul %0, %1, %cst {dimension_numbers = #tpu.dot_dimension_numbers<[1], [0], [0], [1], [0, 0, 1, 1], [], []>} : vector<2x8xf32>, vector<8x32xf32>, vector<2x32xf32> -> vector<2x32xf32>
    %c0_3 = arith.constant 0 : index
    %c0_4 = arith.constant 0 : index
    %3 = vector.load %arg3[%c0_3, %c0_4] : memref<1x32xf32, #tpu.memory_space<vmem>>, vector<1x32xf32>
    %4 = vector.broadcast %3 : vector<1x32xf32> to vector<2x32xf32>
    %5 = arith.addf %2, %4 : vector<2x32xf32>
    %6 = math.tanh %5 : vector<2x32xf32>
    %c0_5 = arith.constant 0 : index
    %c0_6 = arith.constant 0 : index
    %7 = vector.load %arg4[%c0_5, %c0_6] : memref<32x32xf32, #tpu.memory_space<vmem>>, vector<32x32xf32>
    %cst_7 = arith.constant dense<0.000000e+00> : vector<2x32xf32>
    %8 = tpu.matmul %6, %7, %cst_7 {dimension_numbers = #tpu.dot_dimension_numbers<[1], [0], [0], [1], [0, 0, 1, 1], [], []>} : vector<2x32xf32>, vector<32x32xf32>, vector<2x32xf32> -> vector<2x32xf32>
    %c0_8 = arith.constant 0 : index
    %c0_9 = arith.constant 0 : index
    %9 = vector.load %arg5[%c0_8, %c0_9] : memref<1x32xf32, #tpu.memory_space<vmem>>, vector<1x32xf32>
    %10 = vector.broadcast %9 : vector<1x32xf32> to vector<2x32xf32>
    %11 = arith.addf %8, %10 : vector<2x32xf32>
    %12 = math.tanh %11 : vector<2x32xf32>
    %c0_10 = arith.constant 0 : index
    %c0_11 = arith.constant 0 : index
    %13 = vector.load %arg6[%c0_10, %c0_11] : memref<32x128xf32, #tpu.memory_space<vmem>>, vector<32x128xf32>
    %cst_12 = arith.constant dense<0.000000e+00> : vector<2x128xf32>
    %14 = tpu.matmul %12, %13, %cst_12 {dimension_numbers = #tpu.dot_dimension_numbers<[1], [0], [0], [1], [0, 0, 1, 1], [], []>} : vector<2x32xf32>, vector<32x128xf32>, vector<2x128xf32> -> vector<2x128xf32>
    %c0_13 = arith.constant 0 : index
    %c0_14 = arith.constant 0 : index
    %15 = vector.load %arg7[%c0_13, %c0_14] : memref<1x128xf32, #tpu.memory_space<vmem>>, vector<1x128xf32>
    %16 = vector.broadcast %15 : vector<1x128xf32> to vector<2x128xf32>
    %17 = arith.addf %14, %16 : vector<2x128xf32>
    %c0_15 = arith.constant 0 : index
    %c0_16 = arith.constant 0 : index
    %18 = vector.load %arg8[%c0_15, %c0_16] : memref<2x128xf32, #tpu.memory_space<vmem>>, vector<2x128xf32>
    tpu.vector_store %arg8[%c0_15, %c0_16], %17 {strides = array<i32>} : memref<2x128xf32, #tpu.memory_space<vmem>>, vector<2x128xf32>,
    return
  }
  func.func @transform_0(%arg0: i32) -> (i32, i32) {
    %c0_i32 = arith.constant 0 : i32
    %c0_i32_0 = arith.constant 0 : i32
    return %arg0, %c0_i32 : i32, i32
  }
  func.func @transform_1(%arg0: i32) -> (i32, i32) {
    %c0_i32 = arith.constant 0 : i32
    %c0_i32_0 = arith.constant 0 : i32
    %c0_i32_1 = arith.constant 0 : i32
    return %c0_i32, %c0_i32_0 : i32, i32
  }
  func.func @transform_2(%arg0: i32) -> (i32, i32) {
    %c0_i32 = arith.constant 0 : i32
    %c0_i32_0 = arith.constant 0 : i32
    %c0_i32_1 = arith.constant 0 : i32
    return %c0_i32, %c0_i32_0 : i32, i32
  }
  func.func @transform_3(%arg0: i32) -> (i32, i32) {
    %c0_i32 = arith.constant 0 : i32
    %c0_i32_0 = arith.constant 0 : i32
    %c0_i32_1 = arith.constant 0 : i32
    return %c0_i32, %c0_i32_0 : i32, i32
  }
  func.func @transform_4(%arg0: i32) -> (i32, i32) {
    %c0_i32 = arith.constant 0 : i32
    %c0_i32_0 = arith.constant 0 : i32
    %c0_i32_1 = arith.constant 0 : i32
    return %c0_i32, %c0_i32_0 : i32, i32
  }
  func.func @transform_5(%arg0: i32) -> (i32, i32) {
    %c0_i32 = arith.constant 0 : i32
    %c0_i32_0 = arith.constant 0 : i32
    %c0_i32_1 = arith.constant 0 : i32
    return %c0_i32, %c0_i32_0 : i32, i32
  }
  func.func @transform_6(%arg0: i32) -> (i32, i32) {
    %c0_i32 = arith.constant 0 : i32
    %c0_i32_0 = arith.constant 0 : i32
    %c0_i32_1 = arith.constant 0 : i32
    return %c0_i32, %c0_i32_0 : i32, i32
  }
  func.func @transform_7(%arg0: i32) -> (i32, i32) {
    %c0_i32 = arith.constant 0 : i32
    %c0_i32_0 = arith.constant 0 : i32
    return %arg0, %c0_i32 : i32, i32
  }
}

</mosaic_0001>

<llo_original>
// kernel: deterministic_policy_forward.1
$region0: #{deterministic_policy_forward.1}
  #allocation0 [shape = 'u32[]', space=smem, size = 0x4, offset = 0x4, fixed_abs, tag = 'smem constant byte address 0x4 - core index']
  #allocation1 [shape = 'u32[144,128]{1,0:T(1,128)}', space=vmem, size = 0x12000, scoped, tag = 'internal scratch']
  %s0 = inlined_call_operand.vmem [shape: f32[2,8], index: 0, kind: input, shape index: {}]
  %s1 = inlined_call_operand.vmem [shape: f32[8,32], index: 1, kind: input, shape index: {}]
  %s2 = inlined_call_operand.vmem [shape: f32[1,32], index: 2, kind: input, shape index: {}]
  %s3 = inlined_call_operand.vmem [shape: f32[32,32], index: 3, kind: input, shape index: {}]
  %s4 = inlined_call_operand.vmem [shape: f32[1,32], index: 4, kind: input, shape index: {}]
  %s5 = inlined_call_operand.vmem [shape: f32[32,128], index: 5, kind: input, shape index: {}]
  %s6 = inlined_call_operand.vmem [shape: f32[1,128], index: 6, kind: input, shape index: {}]
  %s7 = inlined_call_operand.hbm [shape: f32[2,128], index: 7, kind: output, shape index: {}]
  %s8 = sld [smem:[#allocation0]]
  $region38: #{deterministic_policy_forward.1} parent=0
    _
  %s10 = ssub.s32 1, %s8
  %s11 = scalar_select 0, %s10, %s8
  $region1: #{deterministic_policy_forward.1} parent=0
    #allocation2 [shape = 'u8[1024]{0}', space=vmem, size = 0x400, scoped, tag = 'output window, operand 0, single buffered']
    #allocation3 [shape = 's32[1]{0}', space=sflag, size = 0x4, scoped, tag = 'scoped memory for deterministic_policy_forward.1']
    %12 = vsyncpa [#allocation3], 0
    // Predicated region
    $region2: #{deterministic_policy_forward.1} parent=1 // pred_check
      _
    $region3: #{deterministic_policy_forward.1} parent=1 // pred_check_branch
      %14 = sbr.rel (0) target = $region5
    $region4: #{deterministic_policy_forward.1} parent=1 // pred_region
      _
    $region5: #{deterministic_policy_forward.1} parent=1 // pred_fallthru
      _
    // Predicated region
    $region6: #{deterministic_policy_forward.1} parent=1 // pred_check
      _
    $region7: #{deterministic_policy_forward.1} parent=1 // pred_check_branch
      %16 = sbr.rel (0) target = $region9
    $region8: #{deterministic_policy_forward.1} parent=1 // pred_region
      _
    $region9: #{deterministic_policy_forward.1} parent=1 // pred_fallthru
      _
    // Predicated region
    $region10: #{deterministic_policy_forward.1} parent=1 // pred_check
      _
    $region11: #{deterministic_policy_forward.1} parent=1 // pred_check_branch
      %18 = sbr.rel (0) target = $region13
    $region12: #{deterministic_policy_forward.1} parent=1 // pred_region
      _
    $region13: #{deterministic_policy_forward.1} parent=1 // pred_fallthru
      _
    // Predicated region
    $region14: #{deterministic_policy_forward.1} parent=1 // pred_check
      _
    $region15: #{deterministic_policy_forward.1} parent=1 // pred_check_branch
      %20 = sbr.rel (0) target = $region17
    $region16: #{deterministic_policy_forward.1} parent=1 // pred_region
      _
    $region17: #{deterministic_policy_forward.1} parent=1 // pred_fallthru
      _
    // Predicated region
    $region18: #{deterministic_policy_forward.1} parent=1 // pred_check
      _
    $region19: #{deterministic_policy_forward.1} parent=1 // pred_check_branch
      %22 = sbr.rel (0) target = $region21
    $region20: #{deterministic_policy_forward.1} parent=1 // pred_region
      _
    $region21: #{deterministic_policy_forward.1} parent=1 // pred_fallthru
      _
    // Predicated region
    $region22: #{deterministic_policy_forward.1} parent=1 // pred_check
      _
    $region23: #{deterministic_policy_forward.1} parent=1 // pred_check_branch
      %24 = sbr.rel (0) target = $region25
    $region24: #{deterministic_policy_forward.1} parent=1 // pred_region
      _
    $region25: #{deterministic_policy_forward.1} parent=1 // pred_fallthru
      _
    // Predicated region
    $region26: #{deterministic_policy_forward.1} parent=1 // pred_check
      _
    $region27: #{deterministic_policy_forward.1} parent=1 // pred_check_branch
      %26 = sbr.rel (0) target = $region29
    $region28: #{deterministic_policy_forward.1} parent=1 // pred_region
      _
    $region29: #{deterministic_policy_forward.1} parent=1 // pred_fallthru
      _
    %v27 = vld [vmem:[%s0] sm:$0x3]
    %v28 = vld [vmem:[%s1] sm:$0xff]
    %v29 = vld [vmem:[%s2] sm:$0x1]
    %v31 = vlaneseq
    %v32 = vshrl.u32 %v31, 7
    %v33 = vsub.s32 0, %v32
    %v34 = vrot.slane %v29, %v33
    %vm36 = vcmask 64512
    %v38 = vsel %vm36, %v27, 0
    %40 = vmatprep.subr.mxu0 0.0
    %41 = vmatpush1.msra.mxu0 0.0
    %42 = vmatprep.subr.mxu0 0.0
    %43 = vmatpush1.msra.mxu0 0.0
    %44 = vmatprep.subr.mxu0 0.0
    %45 = vmatpush1.msra.mxu0 0.0
    %46 = vmatprep.subr.mxu0 0.0
    %47 = vmatpush1.msra.mxu0 0.0
    %48 = vmatprep.subr.mxu0 0.0
    %49 = vmatpush1.msra.mxu0 0.0
    %50 = vmatprep.subr.mxu0 0.0
    %51 = vmatpush1.msra.mxu0 0.0
    %52 = vmatprep.subr.mxu0 0.0
    %53 = vmatpush1.msra.mxu0 0.0
    %54 = vmatprep.subr.mxu0 0.0
    %55 = vmatpush1.msra.mxu0 0.0
    %56 = vmatprep.subr.mxu0 0.0
    %57 = vmatpush1.msra.mxu0 0.0
    %58 = vmatprep.subr.mxu0 0.0
    %59 = vmatpush1.msra.mxu0 0.0
    %60 = vmatprep.subr.mxu0 0.0
    %61 = vmatpush1.msra.mxu0 0.0
    %62 = vmatprep.subr.mxu0 0.0
    %63 = vmatpush1.msra.mxu0 0.0
    %64 = vmatprep.subr.mxu0 0.0
    %65 = vmatpush1.msra.mxu0 0.0
    %66 = vmatprep.subr.mxu0 0.0
    %67 = vmatpush1.msra.mxu0 0.0
    %68 = vmatprep.subr.mxu0 0.0
    %69 = vmatpush1.msra.mxu0 0.0
    %70 = vmatprep.subr.mxu0 0.0
    %71 = vmatpush1.msra.mxu0 %v28
    %72 = vmatprep.subr.mxu0 0.0
    %73 = vmatpush2.msra.mxu0 0.0
    %74 = vmatprep.subr.mxu0 0.0
    %75 = vmatpush2.msra.mxu0 0.0
    %76 = vmatprep.subr.mxu0 0.0
    %77 = vmatpush2.msra.mxu0 0.0
    %78 = vmatprep.subr.mxu0 0.0
    %79 = vmatpush2.msra.mxu0 0.0
    %80 = vmatprep.subr.mxu0 0.0
    %81 = vmatpush2.msra.mxu0 0.0
    %82 = vmatprep.subr.mxu0 0.0
    %83 = vmatpush2.msra.mxu0 0.0
    %84 = vmatprep.subr.mxu0 0.0
    %85 = vmatpush2.msra.mxu0 0.0
    %86 = vmatprep.subr.mxu0 0.0
    %87 = vmatpush2.msra.mxu0 0.0
    %88 = vmatprep.subr.mxu0 0.0
    %89 = vmatpush2.msra.mxu0 0.0
    %90 = vmatprep.subr.mxu0 0.0
    %91 = vmatpush2.msra.mxu0 0.0
    %92 = vmatprep.subr.mxu0 0.0
    %93 = vmatpush2.msra.mxu0 0.0
    %94 = vmatprep.subr.mxu0 0.0
    %95 = vmatpush2.msra.mxu0 0.0
    %96 = vmatprep.subr.mxu0 0.0
    %97 = vmatpush2.msra.mxu0 0.0
    %98 = vmatprep.subr.mxu0 0.0
    %99 = vmatpush2.msra.mxu0 0.0
    %100 = vmatprep.subr.mxu0 0.0
    %101 = vmatpush2.msra.mxu0 0.0
    %102 = vmatprep.subr.mxu0 0.0
    %103 = vmatpush2.msra.mxu0 0.0
    %104 = vmatprep.mubr.f32.mxu0 0.0
    %105 = vmatmul.mubr.f32.gmra.mxu0 %v38
    %v106 = vpop.f32.mrf.mxu0
    %v107 = vadd.f32 %v34, %v106
    %v108 = vpop.f32.mrf.mxu0
    %109 = vdwg.mxu0
    %v110 = vtanh.pop %v107
    %v111 = vld [vmem:[%s3] sm:$0xff]
    %v112 = vld [vmem:[%s3 + $0x8] sm:$0xff]
    %v113 = vld [vmem:[%s3 + $0x10] sm:$0xff]
    %v114 = vld [vmem:[%s3 + $0x18] sm:$0xff]
    %v115 = vld [vmem:[%s4] sm:$0x1]
    %v117 = vlaneseq
    %v118 = vshrl.u32 %v117, 7
    %v119 = vsub.s32 0, %v118
    %v120 = vrot.slane %v115, %v119
    %vm122 = vcmask 261120
    %v124 = vsel %vm122, %v110, 0
    %126 = vmatprep.subr.mxu0 0.0
    %127 = vmatpush1.msra.mxu0 0.0
    %128 = vmatprep.subr.mxu0 0.0
    %129 = vmatpush1.msra.mxu0 0.0
    %130 = vmatprep.subr.mxu0 0.0
    %131 = vmatpush1.msra.mxu0 0.0
    %132 = vmatprep.subr.mxu0 0.0
    %133 = vmatpush1.msra.mxu0 0.0
    %134 = vmatprep.subr.mxu0 0.0
    %135 = vmatpush1.msra.mxu0 0.0
    %136 = vmatprep.subr.mxu0 0.0
    %137 = vmatpush1.msra.mxu0 0.0
    %138 = vmatprep.subr.mxu0 0.0
    %139 = vmatpush1.msra.mxu0 0.0
    %140 = vmatprep.subr.mxu0 0.0
    %141 = vmatpush1.msra.mxu0 0.0
    %142 = vmatprep.subr.mxu0 0.0
    %143 = vmatpush1.msra.mxu0 0.0
    %144 = vmatprep.subr.mxu0 0.0
    %145 = vmatpush1.msra.mxu0 0.0
    %146 = vmatprep.subr.mxu0 0.0
    %147 = vmatpush1.msra.mxu0 0.0
    %148 = vmatprep.subr.mxu0 0.0
    %149 = vmatpush1.msra.mxu0 0.0
    %150 = vmatprep.subr.mxu0 0.0
    %151 = vmatpush1.msra.mxu0 %v114
    %152 = vmatprep.subr.mxu0 0.0
    %153 = vmatpush1.msra.mxu0 %v113
    %154 = vmatprep.subr.mxu0 0.0
    %155 = vmatpush1.msra.mxu0 %v112
    %156 = vmatprep.subr.mxu0 0.0
    %157 = vmatpush1.msra.mxu0 %v111
    %158 = vmatprep.subr.mxu0 0.0
    %159 = vmatpush2.msra.mxu0 0.0
    %160 = vmatprep.subr.mxu0 0.0
    %161 = vmatpush2.msra.mxu0 0.0
    %162 = vmatprep.subr.mxu0 0.0
    %163 = vmatpush2.msra.mxu0 0.0
    %164 = vmatprep.subr.mxu0 0.0
    %165 = vmatpush2.msra.mxu0 0.0
    %166 = vmatprep.subr.mxu0 0.0
    %167 = vmatpush2.msra.mxu0 0.0
    %168 = vmatprep.subr.mxu0 0.0
    %169 = vmatpush2.msra.mxu0 0.0
    %170 = vmatprep.subr.mxu0 0.0
    %171 = vmatpush2.msra.mxu0 0.0
    %172 = vmatprep.subr.mxu0 0.0
    %173 = vmatpush2.msra.mxu0 0.0
    %174 = vmatprep.subr.mxu0 0.0
    %175 = vmatpush2.msra.mxu0 0.0
    %176 = vmatprep.subr.mxu0 0.0
    %177 = vmatpush2.msra.mxu0 0.0
    %178 = vmatprep.subr.mxu0 0.0
    %179 = vmatpush2.msra.mxu0 0.0
    %180 = vmatprep.subr.mxu0 0.0
    %181 = vmatpush2.msra.mxu0 0.0
    %182 = vmatprep.subr.mxu0 0.0
    %183 = vmatpush2.msra.mxu0 0.0
    %184 = vmatprep.subr.mxu0 0.0
    %185 = vmatpush2.msra.mxu0 0.0
    %186 = vmatprep.subr.mxu0 0.0
    %187 = vmatpush2.msra.mxu0 0.0
    %188 = vmatprep.subr.mxu0 0.0
    %189 = vmatpush2.msra.mxu0 0.0
    %190 = vmatprep.mubr.f32.mxu0 0.0
    %191 = vmatmul.mubr.f32.gmra.mxu0 %v124
    %v192 = vpop.f32.mrf.mxu0
    %v193 = vadd.f32 %v120, %v192
    %v194 = vpop.f32.mrf.mxu0
    %195 = vdwg.mxu0
    %v196 = vtanh.pop %v193
    %v197 = vld [vmem:[%s5] sm:$0xff]
    %v198 = vld [vmem:[%s5 + $0x8] sm:$0xff]
    %v199 = vld [vmem:[%s5 + $0x10] sm:$0xff]
    %v200 = vld [vmem:[%s5 + $0x18] sm:$0xff]
    %v201 = vld [vmem:[%s6] sm:$0x1]
    %v203 = vlaneseq
    %v204 = vshrl.u32 %v203, 7
    %v205 = vsub.s32 0, %v204
    %v206 = vrot.slane %v201, %v205
    %v209 = vsel %vm122, %v196, 0
    %211 = vmatprep.subr.mxu0 0.0
    %212 = vmatpush1.msra.mxu0 0.0
    %213 = vmatprep.subr.mxu0 0.0
    %214 = vmatpush1.msra.mxu0 0.0
    %215 = vmatprep.subr.mxu0 0.0
    %216 = vmatpush1.msra.mxu0 0.0
    %217 = vmatprep.subr.mxu0 0.0
    %218 = vmatpush1.msra.mxu0 0.0
    %219 = vmatprep.subr.mxu0 0.0
    %220 = vmatpush1.msra.mxu0 0.0
    %221 = vmatprep.subr.mxu0 0.0
    %222 = vmatpush1.msra.mxu0 0.0
    %223 = vmatprep.subr.mxu0 0.0
    %224 = vmatpush1.msra.mxu0 0.0
    %225 = vmatprep.subr.mxu0 0.0
    %226 = vmatpush1.msra.mxu0 0.0
    %227 = vmatprep.subr.mxu0 0.0
    %228 = vmatpush1.msra.mxu0 0.0
    %229 = vmatprep.subr.mxu0 0.0
    %230 = vmatpush1.msra.mxu0 0.0
    %231 = vmatprep.subr.mxu0 0.0
    %232 = vmatpush1.msra.mxu0 0.0
    %233 = vmatprep.subr.mxu0 0.0
    %234 = vmatpush1.msra.mxu0 0.0
    %235 = vmatprep.subr.mxu0 0.0
    %236 = vmatpush1.msra.mxu0 %v200
    %237 = vmatprep.subr.mxu0 0.0
    %238 = vmatpush1.msra.mxu0 %v199
    %239 = vmatprep.subr.mxu0 0.0
    %240 = vmatpush1.msra.mxu0 %v198
    %241 = vmatprep.subr.mxu0 0.0
    %242 = vmatpush1.msra.mxu0 %v197
    %243 = vmatprep.subr.mxu0 0.0
    %244 = vmatpush2.msra.mxu0 0.0
    %245 = vmatprep.subr.mxu0 0.0
    %246 = vmatpush2.msra.mxu0 0.0
    %247 = vmatprep.subr.mxu0 0.0
    %248 = vmatpush2.msra.mxu0 0.0
    %249 = vmatprep.subr.mxu0 0.0
    %250 = vmatpush2.msra.mxu0 0.0
    %251 = vmatprep.subr.mxu0 0.0
    %252 = vmatpush2.msra.mxu0 0.0
    %253 = vmatprep.subr.mxu0 0.0
    %254 = vmatpush2.msra.mxu0 0.0
    %255 = vmatprep.subr.mxu0 0.0
    %256 = vmatpush2.msra.mxu0 0.0
    %257 = vmatprep.subr.mxu0 0.0
    %258 = vmatpush2.msra.mxu0 0.0
    %259 = vmatprep.subr.mxu0 0.0
    %260 = vmatpush2.msra.mxu0 0.0
    %261 = vmatprep.subr.mxu0 0.0
    %262 = vmatpush2.msra.mxu0 0.0
    %263 = vmatprep.subr.mxu0 0.0
    %264 = vmatpush2.msra.mxu0 0.0
    %265 = vmatprep.subr.mxu0 0.0
    %266 = vmatpush2.msra.mxu0 0.0
    %267 = vmatprep.subr.mxu0 0.0
    %268 = vmatpush2.msra.mxu0 0.0
    %269 = vmatprep.subr.mxu0 0.0
    %270 = vmatpush2.msra.mxu0 0.0
    %271 = vmatprep.subr.mxu0 0.0
    %272 = vmatpush2.msra.mxu0 0.0
    %273 = vmatprep.subr.mxu0 0.0
    %274 = vmatpush2.msra.mxu0 0.0
    %275 = vmatprep.mubr.f32.mxu0 0.0
    %276 = vmatmul.mubr.f32.gmra.mxu0 %v209
    %v277 = vpop.f32.mrf.mxu0
    %v278 = vadd.f32 %v206, %v277
    %v279 = vpop.f32.mrf.mxu0
    %280 = vdwg.mxu0
    %281 = vst [vmem:[#allocation2] sm:$0x3] %v278
    // Predicated region
    $region30: #{deterministic_policy_forward.1} parent=1 // pred_check
      _
    $region31: #{deterministic_policy_forward.1} parent=1 // pred_check_branch
      %283 = sbr.rel (0) target = $region33
    $region32: #{deterministic_policy_forward.1} parent=1 // pred_region
      %s285 = ssub.s32 32, 32
      %286 = vsyncadd [#allocation3], %s285
      %s288 = sshll.u32 [#allocation2], 4
      %s289 = int_to_ptr.vmem [resolvable:$true] %s288
      %291 = dma.vmem_to_hbm [thread:$0]  %s289, 32, %s7, [#allocation3]
    $region33: #{deterministic_policy_forward.1} parent=1 // pred_fallthru
      _
    // Predicated region
    $region34: #{deterministic_policy_forward.1} parent=1 // pred_check
      _
    $region35: #{deterministic_policy_forward.1} parent=1 // pred_check_branch
      %293 = sbr.rel (0) target = $region37
    $region36: #{deterministic_policy_forward.1} parent=1 // pred_region
      %294 = dma.done [#allocation3], 32
    $region37: #{deterministic_policy_forward.1} parent=1 // pred_fallthru
      _
    %295 = vsyncpa [#allocation3], 1

</llo_original>
